<compile_context>
chip_gen: v7x
topology: tpu7x:2x2x1
jax: 0.10.0
libtpu: 0.0.40
codegen_flags: <defaults>
</compile_context>

<pallas_src>
import functools

import jax
import jax.numpy as jnp
from jax import lax
from jax.experimental import pallas as pl
from jax.experimental.pallas import tpu as pltpu


def _round_up(v, m):
    return (v + m - 1) // m * m


def _make_conv1d_kernel(c_in_p, c_out_p, tile_l, halo_w):
    def kernel(xl_ref, x_ref, xr_ref, w_ref, b_ref, o_ref):
        # xl_ref: (1, C_in_p, HW)        block just left of this tile (clamped at edge)
        # x_ref : (1, C_in_p, TL)        current input tile
        # xr_ref: (1, C_in_p, HW)        block just right of this tile (clamped at edge)
        # w_ref : (C_out_p, 3*C_in_p)    fused weight, tap-major column blocks [k=0|k=1|k=2]
        # b_ref : (C_out_p, 1)           bias
        # o_ref : (1, C_out_p, TL)       output tile
        j = pl.program_id(1)
        n_j = pl.num_programs(1)

        cur = x_ref[0]                                   # (C_in_p, TL)

        # Halo columns; zeroed at the global sequence edges (== the conv's zero padding).
        left_gate = (j > 0).astype(cur.dtype)
        right_gate = (j < n_j - 1).astype(cur.dtype)
        hl = xl_ref[0][:, halo_w - 1:halo_w] * left_gate     # (C_in_p, 1) = x[:, j*TL - 1]
        hr = xr_ref[0][:, 0:1] * right_gate                  # (C_in_p, 1) = x[:, (j+1)*TL]
        hl_b = jnp.broadcast_to(hl, (c_in_p, tile_l))
        hr_b = jnp.broadcast_to(hr, (c_in_p, tile_l))

        # Shifted copies of the tile via XLU roll (no lane-offset slice copies), then fix
        # the single wrapped column with the halo value.
        col = lax.broadcasted_iota(jnp.int32, (c_in_p, tile_l), 1)
        x_m1 = jnp.where(col == 0, hl_b,
                         pltpu.roll(cur, shift=1, axis=1))            # x[:, l-1]
        x_p1 = jnp.where(col == tile_l - 1, hr_b,
                         pltpu.roll(cur, shift=tile_l - 1, axis=1))    # x[:, l+1]

        # im2col stack (3*C_in_p, TL): one fused MXU contraction instead of 3 thin ones.
        xs = jnp.concatenate([x_m1, cur, x_p1], axis=0)

        acc = jnp.dot(w_ref[...], xs, preferred_element_type=jnp.float32)  # (C_out_p, TL)
        acc = acc + b_ref[...].astype(jnp.float32)
        o_ref[0] = acc.astype(o_ref.dtype)

    return kernel


def conv_feature_extractor(x, weight, bias, *, tile_l=None, compute_dtype=None):
    """Conv1d(kernel_size=3, stride=1, padding=1) forward.

    x:      (N, C_in, L)
    weight: (C_out, C_in, 3)   (PyTorch layout)
    bias:   (C_out,)
    returns (N, C_out, L)
    """
    n, c_in, length = x.shape
    c_out, c_in_w, ksize = weight.shape
    assert c_in == c_in_w and ksize == 3

    # --- L tiling: lane-dense tiles (multiple of 128), halo blocks of width 128. ---
    # TODO(synk): lengths that are not multiples of 128 fall back to a single L tile; for
    # very long non-aligned sequences, pad L to a 128 multiple before calling.
    if tile_l is None:
        if length % 128 == 0:
            tile_l = next(c for c in (1024, 512, 256, 128) if length % c == 0)
        else:
            tile_l = length
    assert length % tile_l == 0
    num_lt = length // tile_l
    halo_w = 128 if (length % 128 == 0 and tile_l % 128 == 0) else tile_l
    tlb_h = tile_l // halo_w          # halo-blocks per L tile
    num_hb = length // halo_w         # total halo blocks along L

    # --- sublane-align channel dims (layout plumbing in the wrapper). ---
    c_in_p = _round_up(c_in, 8)
    c_out_p = _round_up(c_out, 8)

    x_in = x
    w_pad = weight
    if c_in_p != c_in:
        x_in = jnp.pad(x_in, ((0, 0), (0, c_in_p - c_in), (0, 0)))
        w_pad = jnp.pad(w_pad, ((0, 0), (0, c_in_p - c_in), (0, 0)))

    # Fused weight: (C_out, 3, C_in_p) -> (C_out_p, 3*C_in_p), tap-major column blocks.
    w_fused = jnp.transpose(w_pad, (0, 2, 1)).reshape(c_out, 3 * c_in_p)
    if c_out_p != c_out:
        w_fused = jnp.pad(w_fused, ((0, c_out_p - c_out), (0, 0)))
        bias_p = jnp.pad(bias, (0, c_out_p - c_out))
    else:
        bias_p = bias
    b2d = bias_p.reshape(c_out_p, 1)

    if compute_dtype is not None:
        x_in = x_in.astype(compute_dtype)
        w_fused = w_fused.astype(compute_dtype)

    kernel = _make_conv1d_kernel(c_in_p, c_out_p, tile_l, halo_w)

    # Clamped halo index_maps (masked to zero at the global edges inside the kernel).
    left_map = lambda b, j: (b, 0, jnp.maximum(j * tlb_h - 1, 0))
    right_map = lambda b, j: (b, 0, jnp.minimum((j + 1) * tlb_h, num_hb - 1))

    grid_spec = pltpu.PrefetchScalarGridSpec(
        num_scalar_prefetch=0,
        grid=(n, num_lt),
        in_specs=[
            pl.BlockSpec((1, c_in_p, halo_w), left_map),                    # left halo
            pl.BlockSpec((1, c_in_p, tile_l), lambda b, j: (b, 0, j)),      # main tile
            pl.BlockSpec((1, c_in_p, halo_w), right_map),                   # right halo
            pl.BlockSpec((c_out_p, 3 * c_in_p), lambda b, j: (0, 0)),       # fused weight
            pl.BlockSpec((c_out_p, 1), lambda b, j: (0, 0)),                # bias
        ],
        out_specs=pl.BlockSpec((1, c_out_p, tile_l), lambda b, j: (b, 0, j)),
    )

    out = pl.pallas_call(
        kernel,
        out_shape=jax.ShapeDtypeStruct((n, c_out_p, length), x.dtype),
        grid_spec=grid_spec,
        compiler_params=pltpu.CompilerParams(
            dimension_semantics=("parallel", "parallel"),
            vmem_limit_bytes=32 * 1024 * 1024,
        ),
    )(x_in, x_in, x_in, w_fused, b2d)

    if c_out_p != c_out:
        out = out[:, :c_out, :]
    return out


def _reference_conv1d(x, weight, bias):
    # NCL conv, cross-correlation (matches nn.Conv1d), padding=1.
    out = lax.conv_general_dilated(
        x, weight,
        window_strides=(1,),
        padding=((1, 1),),
        dimension_numbers=("NCH", "OIH", "NCH"),
    )
    return out + bias[None, :, None]


if __name__ == "__main__":
    # Small shapes consistent with ConvFeatureExtractor(input_dim=4, output_dim=8).
    # L=256 with TL=128 exercises the multi-tile path (halo passing across tile seams).
    N, C_IN, C_OUT, L = 2, 4, 8, 256

    key = jax.random.PRNGKey(0)
    kx, kw, kb = jax.random.split(key, 3)

    x = jax.random.normal(kx, (N, C_IN, L), dtype=jnp.float32)

    # Deterministic parameter init (PyTorch-style uniform(-bound, bound)).
    fan_in = C_IN * 3
    bound = 1.0 / (fan_in ** 0.5)
    weight = jax.random.uniform(kw, (C_OUT, C_IN, 3), jnp.float32, -bound, bound)
    bias = jax.random.uniform(kb, (C_OUT,), jnp.float32, -bound, bound)

    conv = jax.jit(conv_feature_extractor)
    out = conv(x, weight, bias)
    out = jax.block_until_ready(out)

    ref = _reference_conv1d(x, weight, bias)
    assert out.shape == (N, C_OUT, L)
    assert jnp.allclose(out, ref, atol=1e-5, rtol=1e-5), "mismatch vs reference conv1d"

    print("KERNEL_OK")
</pallas_src>

<mosaic_0001>
module attributes {stable_mosaic.version = 11 : i64} {
  func.func @kernel(%arg0: i32, %arg1: i32, %arg2: memref<1x8x128xf32, #tpu.memory_space<vmem>>, %arg3: memref<1x8x256xf32, #tpu.memory_space<vmem>>, %arg4: memref<1x8x128xf32, #tpu.memory_space<vmem>>, %arg5: memref<8x24xf32, #tpu.memory_space<vmem>>, %arg6: memref<8x1xf32, #tpu.memory_space<vmem>>, %arg7: memref<1x8x256xf32, #tpu.memory_space<vmem>>) attributes {dimension_semantics = [#tpu.dimension_semantics<parallel>, #tpu.dimension_semantics<parallel>], iteration_bounds = array<i64: 2, 1>, scalar_prefetch = 0 : i64, scratch_operands = 0 : i64, tpu.core_type = #tpu.core_type<tc>, window_params = [{transform_indices = @transform_0, window_bounds = array<i64: 1, 8, 128>}, {transform_indices = @transform_1, window_bounds = array<i64: 1, 8, 256>}, {transform_indices = @transform_2, window_bounds = array<i64: 1, 8, 128>}, {pipeline_mode = #tpu.pipeline_mode<synchronous>, transform_indices = @transform_3, window_bounds = array<i64: 8, 24>}, {pipeline_mode = #tpu.pipeline_mode<synchronous>, transform_indices = @transform_4, window_bounds = array<i64: 8, 1>}, {transform_indices = @transform_5, window_bounds = array<i64: 1, 8, 256>}]} {
    %c0 = arith.constant 0 : index
    %c0_0 = arith.constant 0 : index
    %c0_1 = arith.constant 0 : index
    %0 = vector.load %arg3[%c0, %c0_0, %c0_1] : memref<1x8x256xf32, #tpu.memory_space<vmem>>, vector<1x8x256xf32>
    %1 = vector.shape_cast %0 : vector<1x8x256xf32> to vector<8x256xf32>
    %c0_i32 = arith.constant 0 : i32
    %2 = arith.cmpi sgt, %arg1, %c0_i32 : i32
    %3 = arith.extui %2 : i1 to i32
    %4 = arith.sitofp %3 : i32 to f32
    %c0_i32_2 = arith.constant 0 : i32
    %5 = arith.cmpi slt, %arg1, %c0_i32_2 : i32
    %6 = arith.extui %5 : i1 to i32
    %7 = arith.sitofp %6 : i32 to f32
    %c0_3 = arith.constant 0 : index
    %c0_4 = arith.constant 0 : index
    %c0_5 = arith.constant 0 : index
    %8 = vector.load %arg2[%c0_3, %c0_4, %c0_5] : memref<1x8x128xf32, #tpu.memory_space<vmem>>, vector<1x8x128xf32>
    %9 = vector.shape_cast %8 : vector<1x8x128xf32> to vector<8x128xf32>
    %10 = vector.extract_strided_slice %9 {offsets = [0, 127], sizes = [8, 1], strides = [1, 1]} : vector<8x128xf32> to vector<8x1xf32>
    %11 = vector.broadcast %4 : f32 to vector<8x1xf32>
    %12 = arith.mulf %10, %11 : vector<8x1xf32>
    %c0_6 = arith.constant 0 : index
    %c0_7 = arith.constant 0 : index
    %c0_8 = arith.constant 0 : index
    %13 = vector.load %arg4[%c0_6, %c0_7, %c0_8] : memref<1x8x128xf32, #tpu.memory_space<vmem>>, vector<1x8x128xf32>
    %14 = vector.shape_cast %13 : vector<1x8x128xf32> to vector<8x128xf32>
    %15 = vector.extract_strided_slice %14 {offsets = [0, 0], sizes = [8, 1], strides = [1, 1]} : vector<8x128xf32> to vector<8x1xf32>
    %16 = vector.broadcast %7 : f32 to vector<8x1xf32>
    %17 = arith.mulf %15, %16 : vector<8x1xf32>
    %18 = vector.shape_cast %12 : vector<8x1xf32> to vector<8x1xf32>
    %19 = vector.broadcast %18 : vector<8x1xf32> to vector<8x256xf32>
    %20 = vector.shape_cast %17 : vector<8x1xf32> to vector<8x1xf32>
    %21 = vector.broadcast %20 : vector<8x1xf32> to vector<8x256xf32>
    %22 = tpu.iota {dimensions = array<i32: 1>} : vector<8x256xi32>
    %c0_i32_9 = arith.constant 0 : i32
    %23 = vector.broadcast %c0_i32_9 : i32 to vector<8x256xi32>
    %24 = arith.cmpi eq, %22, %23 : vector<8x256xi32>
    %c1_i32 = arith.constant 1 : i32
    %25 = tpu.dynamic_rotate %1 by %c1_i32 dim 1 : vector<8x256xf32>, i32 -> vector<8x256xf32>
    %26 = arith.select %24, %19, %25 : vector<8x256xi1>, vector<8x256xf32>
    %c255_i32 = arith.constant 255 : i32
    %27 = vector.broadcast %c255_i32 : i32 to vector<8x256xi32>
    %28 = arith.cmpi eq, %22, %27 : vector<8x256xi32>
    %c255_i32_10 = arith.constant 255 : i32
    %29 = tpu.dynamic_rotate %1 by %c255_i32_10 dim 1 : vector<8x256xf32>, i32 -> vector<8x256xf32>
    %30 = arith.select %28, %21, %29 : vector<8x256xi1>, vector<8x256xf32>
    %31 = tpu.concatenate %26, %1, %30 in 0 : vector<8x256xf32>, vector<8x256xf32>, vector<8x256xf32> -> vector<24x256xf32>
    %c0_11 = arith.constant 0 : index
    %c0_12 = arith.constant 0 : index
    %32 = vector.load %arg5[%c0_11, %c0_12] : memref<8x24xf32, #tpu.memory_space<vmem>>, vector<8x24xf32>
    %cst = arith.constant dense<0.000000e+00> : vector<8x256xf32>
    %33 = tpu.matmul %32, %31, %cst {dimension_numbers = #tpu.dot_dimension_numbers<[1], [0], [0], [1], [0, 0, 1, 1], [], []>} : vector<8x24xf32>, vector<24x256xf32>, vector<8x256xf32> -> vector<8x256xf32>
    %c0_13 = arith.constant 0 : index
    %c0_14 = arith.constant 0 : index
    %34 = vector.load %arg6[%c0_13, %c0_14] : memref<8x1xf32, #tpu.memory_space<vmem>>, vector<8x1xf32>
    %35 = vector.broadcast %34 : vector<8x1xf32> to vector<8x256xf32>
    %36 = arith.addf %33, %35 : vector<8x256xf32>
    %c0_15 = arith.constant 0 : index
    %c0_16 = arith.constant 0 : index
    %c0_17 = arith.constant 0 : index
    %37 = vector.load %arg7[%c0_15, %c0_16, %c0_17] : memref<1x8x256xf32, #tpu.memory_space<vmem>>, vector<1x8x256xf32>
    %38 = vector.shape_cast %37 : vector<1x8x256xf32> to vector<8x256xf32>
    %39 = vector.shape_cast %36 : vector<8x256xf32> to vector<1x8x256xf32>
    tpu.vector_store %arg7[%c0_15, %c0_16, %c0_17], %39 {strides = array<i32>} : memref<1x8x256xf32, #tpu.memory_space<vmem>>, vector<1x8x256xf32>,
    return
  }
  func.func @transform_0(%arg0: i32, %arg1: i32) -> (i32, i32, i32) {
    %c2_i32 = arith.constant 2 : i32
    %0 = arith.muli %arg1, %c2_i32 : i32
    %c1_i32 = arith.constant 1 : i32
    %1 = arith.subi %0, %c1_i32 : i32
    %c0_i32 = arith.constant 0 : i32
    %2 = arith.maxsi %1, %c0_i32 : i32
    %c0_i32_0 = arith.constant 0 : i32
    %c0_i32_1 = arith.constant 0 : i32
    return %arg0, %c0_i32_0, %2 : i32, i32, i32
  }
  func.func @transform_1(%arg0: i32, %arg1: i32) -> (i32, i32, i32) {
    %c0_i32 = arith.constant 0 : i32
    %c0_i32_0 = arith.constant 0 : i32
    return %arg0, %c0_i32, %arg1 : i32, i32, i32
  }
  func.func @transform_2(%arg0: i32, %arg1: i32) -> (i32, i32, i32) {
    %c1_i32 = arith.constant 1 : i32
    %0 = arith.addi %arg1, %c1_i32 : i32
    %c2_i32 = arith.constant 2 : i32
    %1 = arith.muli %0, %c2_i32 : i32
    %c1_i32_0 = arith.constant 1 : i32
    %2 = arith.minsi %1, %c1_i32_0 : i32
    %c0_i32 = arith.constant 0 : i32
    %c0_i32_1 = arith.constant 0 : i32
    return %arg0, %c0_i32, %2 : i32, i32, i32
  }
  func.func @transform_3(%arg0: i32, %arg1: i32) -> (i32, i32) {
    %c0_i32 = arith.constant 0 : i32
    %c0_i32_0 = arith.constant 0 : i32
    %c0_i32_1 = arith.constant 0 : i32
    return %c0_i32, %c0_i32_0 : i32, i32
  }
  func.func @transform_4(%arg0: i32, %arg1: i32) -> (i32, i32) {
    %c0_i32 = arith.constant 0 : i32
    %c0_i32_0 = arith.constant 0 : i32
    %c0_i32_1 = arith.constant 0 : i32
    return %c0_i32, %c0_i32_0 : i32, i32
  }
  func.func @transform_5(%arg0: i32, %arg1: i32) -> (i32, i32, i32) {
    %c0_i32 = arith.constant 0 : i32
    %c0_i32_0 = arith.constant 0 : i32
    return %arg0, %c0_i32, %arg1 : i32, i32, i32
  }
}

</mosaic_0001>

<llo_original>
// kernel: conv_feature_extractor.1
$region0: #{conv_feature_extractor.1}
  #allocation0 [shape = 'u32[]', space=smem, size = 0x4, offset = 0x4, fixed_abs, tag = 'smem constant byte address 0x4 - core index']
  #allocation1 [shape = 'u32[144,128]{1,0:T(1,128)}', space=vmem, size = 0x12000, scoped, tag = 'internal scratch']
  %s0 = inlined_call_operand.vmem [shape: f32[2,8,256], index: 0, kind: input, shape index: {}, may-alias: {0,1,2}]
  %s1 = inlined_call_operand.vmem [shape: f32[2,8,256], index: 1, kind: input, shape index: {}, may-alias: {0,1,2}]
  %s2 = inlined_call_operand.vmem [shape: f32[2,8,256], index: 2, kind: input, shape index: {}, may-alias: {0,1,2}]
  %s3 = inlined_call_operand.vmem [shape: f32[8,24], index: 3, kind: input, shape index: {}]
  %s4 = inlined_call_operand.vmem [shape: f32[8,1], index: 4, kind: input, shape index: {}]
  %s5 = inlined_call_operand.hbm [shape: f32[2,8,256], index: 5, kind: output, shape index: {}]
  %s6 = sld [smem:[#allocation0]]
  $region53: #{conv_feature_extractor.1} parent=0
    _
  %s8 = ssub.s32 1, %s6
  %s9 = scalar_select 0, %s8, %s6
  $region1: #{conv_feature_extractor.1} parent=0
    #allocation2 [shape = 'u8[16384]{0}', space=vmem, size = 0x4000, scoped, tag = 'output window, operand 0']
    #allocation3 [shape = 's32[2]{0}', space=sflag, size = 0x8, scoped, tag = 'scoped memory for conv_feature_extractor.1']
    %10 = vsyncpa [#allocation3], 0
    %s11 = scalar_lea.sflag [#allocation3], 1
    %12 = vsyncpa %s11, 0
    loop: start=0, step=1, limit=4
    $region2: #{conv_feature_extractor.1} parent=1 // loop_pre_header
      _
    $region3: #{conv_feature_extractor.1} parent=1 // loop_header
      %s14 = sphi 0, %s18
      %p15 = scmp.ge.s32.totalorder %s14, 4
      %s21 = sphi 0, %s33
      %s22 = sphi 0, %s29
      %s23 = sphi 0, %s21
      %s24 = sphi 0, %s22
      %s25 = sphi 0, %s23
      %s26 = sphi 0, %s24
      %s46 = sphi 0, %s48
      %s49 = sphi 0, %s46
      %s50 = sphi 0, %s49
      %s66 = sphi 0, %s50
      %s74 = sphi 0, %s76
      %s77 = sphi 0, %s74
      %s78 = sphi 0, %s77
      %s94 = sphi 0, %s78
      %s110 = sphi 0, %s112
      %s113 = sphi 0, %s110
      %s114 = sphi 0, %s113
      %s130 = sphi 0, %s114
      %s134 = sphi 0, %s134
      %s136 = sphi 0, %s134
      %s137 = sphi 0, %s136
      %s151 = sphi 0, %s137
      %s155 = sphi 0, %s155
      %s157 = sphi 0, %s155
      %s158 = sphi 0, %s157
      %s172 = sphi 0, %s158
      %s180 = sphi 0, %s182
      %s183 = sphi 0, %s180
      %s184 = sphi 0, %s183
      %s200 = sphi 0, %s184
    $region4: #{conv_feature_extractor.1} parent=1 // loop_header_branch
      %17 = sbr.rel (%p15) target = $region8
    $region5: #{conv_feature_extractor.1} parent=1 // loop_body
      %s19 = ssub.s32 %s14, 1
      %s20 = ssub.s32 %s14, 2
      %s27 = sadd.s32 1, %s22
      %p28 = scmp.ge.s32.totalorder %s27, 1
      %s29 = scalar_select %p28, 0, %s27
      %s30 = sadd.s32 1, %s21
      %s31 = scalar_select %p28, %s30, %s21
      %p32 = scmp.ge.s32.totalorder %s31, 2
      %s33 = scalar_select %p32, 0, %s31
      %s34 = smul.u32 %s22, 2
      %s35 = ssub.s32 %s34, 1
      %p36 = scmp.gt.s32.totalorder %s35, 0
      %s37 = scalar_select %p36, %s35, 0
      %s38 = smul.u32 %s29, 2
      %s39 = ssub.s32 %s38, 1
      %p40 = scmp.gt.s32.totalorder %s39, 0
      %s41 = scalar_select %p40, %s39, 0
      %s42 = ssub.s32 %s21, %s33
      %s43 = ssub.s32 %s37, %s41
      %s44 = sor.u32 %s42, %s43
      %p45 = scmp.eq.s32.totalorder %s44, 0
      %s47 = sadd.s32 %s46, 1
      %s48 = scalar_select %p45, %s46, %s47
      %p51 = pneg %p45
      %p52 = scmp.eq.s32.totalorder %s14, 1
      %p53 = por %p51, %p52
      %p54 = scmp.ne.s32.totalorder %s46, %s49
      %p55 = scmp.eq.s32.totalorder %s14, 0
      %p56 = por %p54, %p55
      %p57 = scmp.ne.s32.totalorder %s46, %s49
      %p58 = scmp.eq.s32.totalorder %s19, 1
      %p59 = por %p57, %p58
      %p60 = scmp.ne.s32.totalorder %s49, %s50
      %p61 = scmp.eq.s32.totalorder %s19, 0
      %p62 = por %p60, %p61
      %p63 = scmp.ne.s32.totalorder %s49, %s50
      %p64 = scmp.eq.s32.totalorder %s20, 1
      %p65 = por %p63, %p64
      %p67 = scmp.ne.s32.totalorder %s50, %s66
      %p68 = scmp.eq.s32.totalorder %s20, 0
      %p69 = por %p67, %p68
      %s70 = ssub.s32 %s21, %s33
      %s71 = ssub.s32 %s22, %s29
      %s72 = sor.u32 %s70, %s71
      %p73 = scmp.eq.s32.totalorder %s72, 0
      %s75 = sadd.s32 %s74, 1
      %s76 = scalar_select %p73, %s74, %s75
      %p79 = pneg %p73
      %p80 = scmp.eq.s32.totalorder %s14, 1
      %p81 = por %p79, %p80
      %p82 = scmp.ne.s32.totalorder %s74, %s77
      %p83 = scmp.eq.s32.totalorder %s14, 0
      %p84 = por %p82, %p83
      %p85 = scmp.ne.s32.totalorder %s74, %s77
      %p86 = scmp.eq.s32.totalorder %s19, 1
      %p87 = por %p85, %p86
      %p88 = scmp.ne.s32.totalorder %s77, %s78
      %p89 = scmp.eq.s32.totalorder %s19, 0
      %p90 = por %p88, %p89
      %p91 = scmp.ne.s32.totalorder %s77, %s78
      %p92 = scmp.eq.s32.totalorder %s20, 1
      %p93 = por %p91, %p92
      %p95 = scmp.ne.s32.totalorder %s78, %s94
      %p96 = scmp.eq.s32.totalorder %s20, 0
      %p97 = por %p95, %p96
      %s98 = sadd.s32 %s22, 1
      %s99 = smul.u32 %s98, 2
      %p100 = scmp.lt.s32.totalorder %s99, 1
      %s101 = scalar_select %p100, %s99, 1
      %s102 = sadd.s32 %s29, 1
      %s103 = smul.u32 %s102, 2
      %p104 = scmp.lt.s32.totalorder %s103, 1
      %s105 = scalar_select %p104, %s103, 1
      %s106 = ssub.s32 %s21, %s33
      %s107 = ssub.s32 %s101, %s105
      %s108 = sor.u32 %s106, %s107
      %p109 = scmp.eq.s32.totalorder %s108, 0
      %s111 = sadd.s32 %s110, 1
      %s112 = scalar_select %p109, %s110, %s111
      %p115 = pneg %p109
      %p116 = scmp.eq.s32.totalorder %s14, 1
      %p117 = por %p115, %p116
      %p118 = scmp.ne.s32.totalorder %s110, %s113
      %p119 = scmp.eq.s32.totalorder %s14, 0
      %p120 = por %p118, %p119
      %p121 = scmp.ne.s32.totalorder %s110, %s113
      %p122 = scmp.eq.s32.totalorder %s19, 1
      %p123 = por %p121, %p122
      %p124 = scmp.ne.s32.totalorder %s113, %s114
      %p125 = scmp.eq.s32.totalorder %s19, 0
      %p126 = por %p124, %p125
      %p127 = scmp.ne.s32.totalorder %s113, %s114
      %p128 = scmp.eq.s32.totalorder %s20, 1
      %p129 = por %p127, %p128
      %p131 = scmp.ne.s32.totalorder %s114, %s130
      %p132 = scmp.eq.s32.totalorder %s20, 0
      %p133 = por %p131, %p132
      %s135 = sadd.s32 %s134, 1
      %p138 = scmp.eq.s32.totalorder %s14, 1
      %p139 = scmp.ne.s32.totalorder %s134, %s136
      %p140 = scmp.eq.s32.totalorder %s14, 0
      %p141 = por %p139, %p140
      %p142 = scmp.ne.s32.totalorder %s134, %s136
      %p143 = scmp.eq.s32.totalorder %s19, 1
      %p144 = por %p142, %p143
      %p145 = scmp.ne.s32.totalorder %s136, %s137
      %p146 = scmp.eq.s32.totalorder %s19, 0
      %p147 = por %p145, %p146
      %p148 = scmp.ne.s32.totalorder %s136, %s137
      %p149 = scmp.eq.s32.totalorder %s20, 1
      %p150 = por %p148, %p149
      %p152 = scmp.ne.s32.totalorder %s137, %s151
      %p153 = scmp.eq.s32.totalorder %s20, 0
      %p154 = por %p152, %p153
      %s156 = sadd.s32 %s155, 1
      %p159 = scmp.eq.s32.totalorder %s14, 1
      %p160 = scmp.ne.s32.totalorder %s155, %s157
      %p161 = scmp.eq.s32.totalorder %s14, 0
      %p162 = por %p160, %p161
      %p163 = scmp.ne.s32.totalorder %s155, %s157
      %p164 = scmp.eq.s32.totalorder %s19, 1
      %p165 = por %p163, %p164
      %p166 = scmp.ne.s32.totalorder %s157, %s158
      %p167 = scmp.eq.s32.totalorder %s19, 0
      %p168 = por %p166, %p167
      %p169 = scmp.ne.s32.totalorder %s157, %s158
      %p170 = scmp.eq.s32.totalorder %s20, 1
      %p171 = por %p169, %p170
      %p173 = scmp.ne.s32.totalorder %s158, %s172
      %p174 = scmp.eq.s32.totalorder %s20, 0
      %p175 = por %p173, %p174
      %s176 = ssub.s32 %s21, %s33
      %s177 = ssub.s32 %s22, %s29
      %s178 = sor.u32 %s176, %s177
      %p179 = scmp.eq.s32.totalorder %s178, 0
      %s181 = sadd.s32 %s180, 1
      %s182 = scalar_select %p179, %s180, %s181
      %p185 = pneg %p179
      %p186 = scmp.eq.s32.totalorder %s14, 1
      %p187 = por %p185, %p186
      %p188 = scmp.ne.s32.totalorder %s180, %s183
      %p189 = scmp.eq.s32.totalorder %s14, 0
      %p190 = por %p188, %p189
      %p191 = scmp.ne.s32.totalorder %s180, %s183
      %p192 = scmp.eq.s32.totalorder %s19, 1
      %p193 = por %p191, %p192
      %p194 = scmp.ne.s32.totalorder %s183, %s184
      %p195 = scmp.eq.s32.totalorder %s19, 0
      %p196 = por %p194, %p195
      %p197 = scmp.ne.s32.totalorder %s183, %s184
      %p198 = scmp.eq.s32.totalorder %s20, 1
      %p199 = por %p197, %p198
      %p201 = scmp.ne.s32.totalorder %s184, %s200
      %p202 = scmp.eq.s32.totalorder %s20, 0
      %p203 = por %p201, %p202
      %p204 = scmp.le.s32.totalorder 1, %s14
      %p205 = scmp.lt.s32.totalorder %s14, 3
      %p206 = pnand %p204, %p205
      %p207 = pneg %p206
      // Predicated region
      $region9: #{conv_feature_extractor.1} parent=5 // pred_check
        _
      $region10: #{conv_feature_extractor.1} parent=5 // pred_check_branch
        %209 = sbr.rel (%p206) target = $region12
      $region11: #{conv_feature_extractor.1} parent=5 // pred_region
        %s210 = ssub.s32 %s14, 1
        // Predicated region
        $region13: #{conv_feature_extractor.1} parent=11 // pred_check
          %p211 = pneg %p147
        $region14: #{conv_feature_extractor.1} parent=11 // pred_check_branch
          %213 = sbr.rel (%p211) target = $region16
        $region15: #{conv_feature_extractor.1} parent=11 // pred_region
          _
        $region16: #{conv_feature_extractor.1} parent=11 // pred_fallthru
          _
        // Predicated region
        $region17: #{conv_feature_extractor.1} parent=11 // pred_check
          %p214 = pneg %p168
        $region18: #{conv_feature_extractor.1} parent=11 // pred_check_branch
          %216 = sbr.rel (%p214) target = $region20
        $region19: #{conv_feature_extractor.1} parent=11 // pred_region
          _
        $region20: #{conv_feature_extractor.1} parent=11 // pred_fallthru
          _
      $region12: #{conv_feature_extractor.1} parent=5 // pred_fallthru
        _
      %p217 = scmp.lt.s32.totalorder %s14, 2
      // Predicated region
      $region21: #{conv_feature_extractor.1} parent=5 // pred_check
        %p218 = pneg %p217
      $region22: #{conv_feature_extractor.1} parent=5 // pred_check_branch
        %220 = sbr.rel (%p218) target = $region24
      $region23: #{conv_feature_extractor.1} parent=5 // pred_region
        // Predicated region
        $region25: #{conv_feature_extractor.1} parent=23 // pred_check
          %p221 = pneg %p56
        $region26: #{conv_feature_extractor.1} parent=23 // pred_check_branch
          %223 = sbr.rel (%p221) target = $region28
        $region27: #{conv_feature_extractor.1} parent=23 // pred_region
          %s224 = smul.u32 %s22, 2
          %s225 = ssub.s32 %s224, 1
          %p226 = scmp.gt.s32.totalorder %s225, 0
          %s227 = scalar_select %p226, %s225, 0
          %p228 = scmp.lt.s32.totalorder %s21, 1
          %s229 = scalar_select %p228, %s21, 1
          %p230 = scmp.lt.s32.totalorder %s227, 1
          %s231 = scalar_select %p230, %s227, 1
          %s232 = smul.addr %s229, 2
          %s233 = sadd.s32 %s231, %s232
          %s234 = smul.addr %s233, 8
          %s235 = scalar_lea.vmem %s0, %s234
          %s236 = smul.u32 %s22, 2
          %s237 = ssub.s32 %s236, 1
          %p238 = scmp.gt.s32.totalorder %s237, 0
          %s239 = scalar_select %p238, %s237, 0
        $region28: #{conv_feature_extractor.1} parent=23 // pred_fallthru
          _
        // Predicated region
        $region29: #{conv_feature_extractor.1} parent=23 // pred_check
          %p240 = pneg %p84
        $region30: #{conv_feature_extractor.1} parent=23 // pred_check_branch
          %242 = sbr.rel (%p240) target = $region32
        $region31: #{conv_feature_extractor.1} parent=23 // pred_region
          %s243 = smul.u32 2, %s22
          %p244 = scmp.lt.s32.totalorder %s21, 1
          %s245 = scalar_select %p244, %s21, 1
          %p246 = scmp.lt.s32.totalorder %s243, 1
          %s247 = scalar_select %p246, %s243, 1
          %s248 = smul.addr %s245, 2
          %s249 = sadd.s32 %s247, %s248
          %s250 = smul.addr %s249, 8
          %s251 = scalar_lea.vmem %s1, %s250
          %s252 = smul.u32 2, %s22
        $region32: #{conv_feature_extractor.1} parent=23 // pred_fallthru
          _
        // Predicated region
        $region33: #{conv_feature_extractor.1} parent=23 // pred_check
          %p253 = pneg %p120
        $region34: #{conv_feature_extractor.1} parent=23 // pred_check_branch
          %255 = sbr.rel (%p253) target = $region36
        $region35: #{conv_feature_extractor.1} parent=23 // pred_region
          %s256 = sadd.s32 %s22, 1
          %s257 = smul.u32 %s256, 2
          %p258 = scmp.lt.s32.totalorder %s257, 1
          %s259 = scalar_select %p258, %s257, 1
          %p260 = scmp.lt.s32.totalorder %s21, 1
          %s261 = scalar_select %p260, %s21, 1
          %p262 = scmp.lt.s32.totalorder %s259, 1
          %s263 = scalar_select %p262, %s259, 1
          %s264 = smul.addr %s261, 2
          %s265 = sadd.s32 %s263, %s264
          %s266 = smul.addr %s265, 8
          %s267 = scalar_lea.vmem %s2, %s266
          %s268 = sadd.s32 %s22, 1
          %s269 = smul.u32 %s268, 2
          %p270 = scmp.lt.s32.totalorder %s269, 1
          %s271 = scalar_select %p270, %s269, 1
        $region36: #{conv_feature_extractor.1} parent=23 // pred_fallthru
          _
      $region24: #{conv_feature_extractor.1} parent=5 // pred_fallthru
        _
      %p272 = scmp.le.s32.totalorder 1, %s14
      %p273 = scmp.lt.s32.totalorder %s14, 3
      %p274 = pnand %p272, %p273
      %p275 = pneg %p274
      // Predicated region
      $region37: #{conv_feature_extractor.1} parent=5 // pred_check
        _
      $region38: #{conv_feature_extractor.1} parent=5 // pred_check_branch
        %277 = sbr.rel (%p274) target = $region40
      $region39: #{conv_feature_extractor.1} parent=5 // pred_region
        %s278 = ssub.s32 %s14, 1
        %s279 = smul.u32 %s24, 2
        %s280 = ssub.s32 %s279, 1
        %p281 = scmp.gt.s32.totalorder %s280, 0
        %s282 = scalar_select %p281, %s280, 0
        %p283 = scmp.lt.s32.totalorder %s23, 1
        %s284 = scalar_select %p283, %s23, 1
        %p285 = scmp.lt.s32.totalorder %s282, 1
        %s286 = scalar_select %p285, %s282, 1
        %s287 = smul.addr %s284, 2
        %s288 = sadd.s32 %s286, %s287
        %s289 = smul.addr %s288, 8
        %s290 = scalar_lea.vmem %s0, %s289
        %p291 = pneg %p62
        %p292 = pneg %p59
        %s293 = smul.u32 2, %s24
        %p294 = scmp.lt.s32.totalorder %s23, 1
        %s295 = scalar_select %p294, %s23, 1
        %p296 = scmp.lt.s32.totalorder %s293, 1
        %s297 = scalar_select %p296, %s293, 1
        %s298 = smul.addr %s295, 2
        %s299 = sadd.s32 %s297, %s298
        %s300 = smul.addr %s299, 8
        %s301 = scalar_lea.vmem %s1, %s300
        %p302 = pneg %p90
        %p303 = pneg %p87
        %s304 = sadd.s32 %s24, 1
        %s305 = smul.u32 %s304, 2
        %p306 = scmp.lt.s32.totalorder %s305, 1
        %s307 = scalar_select %p306, %s305, 1
        %p308 = scmp.lt.s32.totalorder %s23, 1
        %s309 = scalar_select %p308, %s23, 1
        %p310 = scmp.lt.s32.totalorder %s307, 1
        %s311 = scalar_select %p310, %s307, 1
        %s312 = smul.addr %s309, 2
        %s313 = sadd.s32 %s311, %s312
        %s314 = smul.addr %s313, 8
        %s315 = scalar_lea.vmem %s2, %s314
        %p316 = pneg %p126
        %p317 = pneg %p123
        %p318 = pneg %p147
        %p319 = pneg %p144
        %p320 = pneg %p168
        %p321 = pneg %p165
        %p322 = pneg %p196
        %p323 = pneg %p193
        %s324 = sand.u32 %s183, 1
        %s325 = scalar_lea.sflag [#allocation3], %s324
        %s326 = sand.u32 %s183, 1
        %s327 = smul.addr %s326, 16
        %s328 = scalar_lea.vmem [#allocation2], %s327
        %s329 = smul.u32 %s24, 2
        %s330 = ssub.s32 %s329, 1
        %p331 = scmp.gt.s32.totalorder %s330, 0
        %s332 = scalar_select %p331, %s330, 0
        %p333 = scmp.lt.s32.totalorder %s23, 1
        %s334 = scalar_select %p333, %s23, 1
        %p335 = scmp.lt.s32.totalorder %s332, 1
        %s336 = scalar_select %p335, %s332, 1
        %s337 = smul.addr %s334, 2
        %s338 = sadd.s32 %s336, %s337
        %s339 = smul.addr %s338, 8
        %s340 = scalar_lea.vmem %s0, %s339
        %s341 = smul.u32 %s24, 2
        %s342 = ssub.s32 %s341, 1
        %p343 = scmp.gt.s32.totalorder %s342, 0
        %s344 = scalar_select %p343, %s342, 0
        %s345 = smul.u32 2, %s24
        %p346 = scmp.lt.s32.totalorder %s23, 1
        %s347 = scalar_select %p346, %s23, 1
        %p348 = scmp.lt.s32.totalorder %s345, 1
        %s349 = scalar_select %p348, %s345, 1
        %s350 = smul.addr %s347, 2
        %s351 = sadd.s32 %s349, %s350
        %s352 = smul.addr %s351, 8
        %s353 = scalar_lea.vmem %s1, %s352
        %s354 = smul.u32 2, %s24
        %s355 = sadd.s32 %s24, 1
        %s356 = smul.u32 %s355, 2
        %p357 = scmp.lt.s32.totalorder %s356, 1
        %s358 = scalar_select %p357, %s356, 1
        %p359 = scmp.lt.s32.totalorder %s23, 1
        %s360 = scalar_select %p359, %s23, 1
        %p361 = scmp.lt.s32.totalorder %s358, 1
        %s362 = scalar_select %p361, %s358, 1
        %s363 = smul.addr %s360, 2
        %s364 = sadd.s32 %s362, %s363
        %s365 = smul.addr %s364, 8
        %s366 = scalar_lea.vmem %s2, %s365
        %s367 = sadd.s32 %s24, 1
        %s368 = smul.u32 %s367, 2
        %p369 = scmp.lt.s32.totalorder %s368, 1
        %s370 = scalar_select %p369, %s368, 1
        %s371 = smul.u32 2, %s24
        %v372 = vld [vmem:[%s353] sm:$0xff]
        %v373 = vld [vmem:[%s353 + $0x8] sm:$0xff]
        %p374 = scmp.gt.s32.totalorder %s24, 0
        %s375 = scalar_select %p374, 1, 0
        %s376 = scvt.s32.f32 %s375
        %p377 = scmp.lt.s32.totalorder %s24, 0
        %s378 = scalar_select %p377, 1, 0
        %s379 = scvt.s32.f32 %s378
        %v380 = vld [vmem:[%s340] sm:$0xff]
        %v381 = vstv %s376
        %v382 = vmul.f32 %v380, %v381
        %v383 = vld [vmem:[%s366] sm:$0xff]
        %v384 = vstv %s379
        %v385 = vmul.f32 %v383, %v384
        %387 = vset.pattern.permute.xlu0 127
        %388 = vperm.xlu0 %387, %v382
        %v389 = vpop.permute.xlu0 %388
        %392 = vset.pattern.permute.xlu0 0
        %393 = vperm.xlu0 %392, %v385
        %v394 = vpop.permute.xlu0 %393
        %v396 = vlaneseq
        %v397 = vand.u32 %v396, 127
        %v398 = vadd.s32 %v397, 128
        %vm399 = vcmp.eq.s32.totalorder %v397, 0
        %vm400 = vcmp.eq.s32.totalorder %v398, 0
        %401 = vrot.lane.b32.xlu0 %v372, 1
        %v402 = vpop.permute.xlu0 %401
        %403 = vrot.lane.b32.xlu0 %v373, 1
        %v404 = vpop.permute.xlu0 %403
        %vm405 = vcmp.lt.s32.totalorder %v397, 1
        %v406 = vsel %vm405, %v402, %v404
        %v407 = vsel %vm405, %v404, %v402
        %v408 = vsel %vm399, %v389, %v407
        %v409 = vsel %vm400, %v389, %v406
        %vm410 = vcmp.eq.s32.totalorder %v397, 255
        %vm411 = vcmp.eq.s32.totalorder %v398, 255
        %412 = vrot.lane.b32.xlu0 %v372, 127
        %v413 = vpop.permute.xlu0 %412
        %414 = vrot.lane.b32.xlu0 %v373, 127
        %v415 = vpop.permute.xlu0 %414
        %vm416 = vcmp.lt.s32.totalorder %v397, 127
        %v417 = vsel %vm416, %v413, %v415
        %v418 = vsel %vm416, %v415, %v413
        %v419 = vsel %vm410, %v394, %v417
        %v420 = vsel %vm411, %v394, %v418
        %v421 = vld [vmem:[%s3] sm:$0xff]
        %v422 = vld [vmem:[%s4] sm:$0xff]
        %424 = vset.pattern.permute.xlu0 0
        %425 = vperm.xlu0 %424, %v422
        %v426 = vpop.permute.xlu0 %425
        %vm428 = vcmask 195584
        %v430 = vsel %vm428, %v421, 0
        %432 = vmatprep.subr.mxu0 %v409
        %433 = vmatpush1.msra.mxu0 %v408
        %434 = vmatprep.subr.mxu0 %v373
        %435 = vmatpush1.msra.mxu0 %v372
        %436 = vmatprep.subr.mxu0 %v420
        %437 = vmatpush1.msra.mxu0 %v419
        %438 = vmatprep.subr.mxu0 0.0
        %439 = vmatpush1.msra.mxu0 0.0
        %440 = vmatprep.subr.mxu0 0.0
        %441 = vmatpush1.msra.mxu0 0.0
        %442 = vmatprep.subr.mxu0 0.0
        %443 = vmatpush1.msra.mxu0 0.0
        %444 = vmatprep.subr.mxu0 0.0
        %445 = vmatpush1.msra.mxu0 0.0
        %446 = vmatprep.subr.mxu0 0.0
        %447 = vmatpush1.msra.mxu0 0.0
        %448 = vmatprep.subr.mxu0 0.0
        %449 = vmatpush1.msra.mxu0 0.0
        %450 = vmatprep.subr.mxu0 0.0
        %451 = vmatpush1.msra.mxu0 0.0
        %452 = vmatprep.subr.mxu0 0.0
        %453 = vmatpush1.msra.mxu0 0.0
        %454 = vmatprep.subr.mxu0 0.0
        %455 = vmatpush1.msra.mxu0 0.0
        %456 = vmatprep.subr.mxu0 0.0
        %457 = vmatpush1.msra.mxu0 0.0
        %458 = vmatprep.subr.mxu0 0.0
        %459 = vmatpush1.msra.mxu0 0.0
        %460 = vmatprep.subr.mxu0 0.0
        %461 = vmatpush1.msra.mxu0 0.0
        %462 = vmatprep.subr.mxu0 0.0
        %463 = vmatpush1.msra.mxu0 0.0
        %464 = vmatprep.subr.mxu0 0.0
        %465 = vmatpush1.msra.mxu0 0.0
        %466 = vmatprep.subr.mxu0 0.0
        %467 = vmatpush1.msra.mxu0 0.0
        %468 = vmatprep.subr.mxu0 0.0
        %469 = vmatpush1.msra.mxu0 0.0
        %470 = vmatprep.subr.mxu0 0.0
        %471 = vmatpush1.msra.mxu0 0.0
        %472 = vmatprep.subr.mxu0 0.0
        %473 = vmatpush1.msra.mxu0 0.0
        %474 = vmatprep.subr.mxu0 0.0
        %475 = vmatpush1.msra.mxu0 0.0
        %476 = vmatprep.subr.mxu0 0.0
        %477 = vmatpush1.msra.mxu0 0.0
        %478 = vmatprep.subr.mxu0 0.0
        %479 = vmatpush1.msra.mxu0 0.0
        %480 = vmatprep.subr.mxu0 0.0
        %481 = vmatpush1.msra.mxu0 0.0
        %482 = vmatprep.subr.mxu0 0.0
        %483 = vmatpush1.msra.mxu0 0.0
        %484 = vmatprep.subr.mxu0 0.0
        %485 = vmatpush1.msra.mxu0 0.0
        %486 = vmatprep.subr.mxu0 0.0
        %487 = vmatpush1.msra.mxu0 0.0
        %488 = vmatprep.subr.mxu0 0.0
        %489 = vmatpush1.msra.mxu0 0.0
        %490 = vmatprep.subr.mxu0 0.0
        %491 = vmatpush1.msra.mxu0 0.0
        %492 = vmatprep.subr.mxu0 0.0
        %493 = vmatpush1.msra.mxu0 0.0
        %494 = vmatprep.subr.mxu0 0.0
        %495 = vmatpush1.msra.mxu0 0.0
        %496 = vmatprep.mubr.f32.mxu0 0.0
        %497 = vmatmul.mubr.f32.gmra.mrb[0].mxu0 %v430
        %v498 = vpop.f32.mrb[0].mxu0
        %v499 = vadd.f32 %v426, %v498
        %v500 = vpop.f32.mrb[0].mxu0
        %v501 = vadd.f32 %v426, %v500
        %502 = vdwg.mxu0
        %503 = vst [vmem:[%s328] sm:$0xff] %v499
        %504 = vst [vmem:[%s328 + $0x8] sm:$0xff] %v501
        %s505 = sand.u32 %s183, 1
        %s506 = scalar_lea.sflag [#allocation3], %s505
        %s507 = sand.u32 %s183, 1
        %s508 = smul.addr %s507, 16
        %s509 = scalar_lea.vmem [#allocation2], %s508
        // Predicated region
        $region41: #{conv_feature_extractor.1} parent=39 // pred_check
          %p510 = pneg %p193
        $region42: #{conv_feature_extractor.1} parent=39 // pred_check_branch
          %512 = sbr.rel (%p510) target = $region44
        $region43: #{conv_feature_extractor.1} parent=39 // pred_region
          %s513 = smul.u32 2, %s24
          %s515 = ssub.s32 256, 256
          %516 = vsyncadd %s506, %s515
          %s517 = smul.addr %s23, 2
          %s518 = sadd.s32 %s513, %s517
          %s519 = smul.addr %s518, 128
          %s520 = scalar_lea.hbm %s5, %s519
          %s522 = sshll.u32 %s509, 4
          %s523 = int_to_ptr.vmem [resolvable:$true] %s522
          %525 = dma.vmem_to_hbm [thread:$0]  %s523, 256, %s520, %s506
        $region44: #{conv_feature_extractor.1} parent=39 // pred_fallthru
          _
      $region40: #{conv_feature_extractor.1} parent=5 // pred_fallthru
        _
      %p526 = scmp.le.s32.totalorder 2, %s14
      // Predicated region
      $region45: #{conv_feature_extractor.1} parent=5 // pred_check
        %p527 = pneg %p526
      $region46: #{conv_feature_extractor.1} parent=5 // pred_check_branch
        %529 = sbr.rel (%p527) target = $region48
      $region47: #{conv_feature_extractor.1} parent=5 // pred_region
        %s530 = ssub.s32 %s14, 2
        // Predicated region
        $region49: #{conv_feature_extractor.1} parent=47 // pred_check
          %p531 = pneg %p199
        $region50: #{conv_feature_extractor.1} parent=47 // pred_check_branch
          %533 = sbr.rel (%p531) target = $region52
        $region51: #{conv_feature_extractor.1} parent=47 // pred_region
          %s534 = sand.u32 %s184, 1
          %s535 = scalar_lea.sflag [#allocation3], %s534
          %s536 = sand.u32 %s184, 1
          %s537 = smul.addr %s536, 16
          %s538 = scalar_lea.vmem [#allocation2], %s537
          %539 = dma.done %s535, 256
        $region52: #{conv_feature_extractor.1} parent=47 // pred_fallthru
          _
      $region48: #{conv_feature_extractor.1} parent=5 // pred_fallthru
        _
    $region6: #{conv_feature_extractor.1} parent=1 // loop_footer
      %s18 = sadd.s32 1, %s14
    $region7: #{conv_feature_extractor.1} parent=1 // loop_footer_branch
      %13 = sbr.rel target = $region3
    $region8: #{conv_feature_extractor.1} parent=1 // loop_exit
      _
    %540 = vsyncpa [#allocation3], 1
    %s541 = scalar_lea.sflag [#allocation3], 1
    %542 = vsyncpa %s541, 1

</llo_original>
